<compile_context>
chip_gen: v7x
topology: tpu7x:2x2x1
jax: 0.10.0
libtpu: 0.0.40
codegen_flags: <defaults>
</compile_context>

<pallas_src>
import functools
import math

import jax
import jax.numpy as jnp
from jax import lax
from jax.scipy.linalg import solve_triangular
from jax.experimental import pallas as pl
from jax.experimental.pallas import tpu as pltpu


_LANE = 128
_RESIDENT_MAX_MINOR = 256            # non-contracted dim small enough to keep operand whole in VMEM
_RESIDENT_MAX_BYTES = 2 * 1024 * 1024


# ----------------------------------------------------------------------------
# MXU matmul kernels
# ----------------------------------------------------------------------------
def _mm_kernel_single(a_ref, b_ref, o_ref, *, trans_a):
    """Single contraction block: write the output tile directly (no scratch)."""
    dims = (((0,), (0,)), ((), ())) if trans_a else (((1,), (0,)), ((), ()))
    o_ref[...] = lax.dot_general(
        a_ref[...], b_ref[...], dims,
        preferred_element_type=jnp.float32).astype(o_ref.dtype)


def _mm_kernel_acc(a_ref, b_ref, o_ref, acc_ref, *, trans_a, a_resident,
                   b_resident, tk):
    """Multi-block contraction: f32 VMEM accumulator with pl.when init/finalize.

    VMEM-resident (skinny) operands are sliced along K in-kernel instead of being
    re-DMAed on every (i, k) grid step.
    """
    k = pl.program_id(2)

    @pl.when(k == 0)
    def _init():
        acc_ref[...] = jnp.zeros_like(acc_ref)

    start = pl.multiple_of(k * tk, tk)
    if a_resident:
        a = a_ref[pl.ds(start, tk), :] if trans_a else a_ref[:, pl.ds(start, tk)]
    else:
        a = a_ref[...]
    if b_resident:
        b = b_ref[pl.ds(start, tk), :]
    else:
        b = b_ref[...]

    dims = (((0,), (0,)), ((), ())) if trans_a else (((1,), (0,)), ((), ()))
    acc_ref[...] += lax.dot_general(a, b, dims,
                                    preferred_element_type=jnp.float32)

    @pl.when(k == pl.num_programs(2) - 1)
    def _finalize():
        o_ref[...] = acc_ref[...].astype(o_ref.dtype)


def _tile(dim, target, align=_LANE):
    """Return (tile, padded_dim).

    dim <= target -> single full-extent block (no (8,128) constraint, no padding).
    Otherwise the dim is padded up to a multiple of `align` and tiled with the
    largest multiple of `align` <= target that divides the padded dim.
    """
    if dim <= target:
        return dim, dim
    padded = ((dim + align - 1) // align) * align
    t = (target // align) * align
    while t > align and padded % t != 0:
        t -= align
    return max(t, align), padded


def _tiled_matmul(a, b, *, trans_a, tm_target=512, tn_target=512,
                  tk_target=None):
    """out = (a.T if trans_a else a) @ b with f32 accumulation on the MXU.

    Operands are streamed at their given dtype (pass bf16 for bandwidth-bound
    calls).  Skinny operands (minor dim <= 256, a few MiB) are kept fully
    VMEM-resident; big operands are tiled with an (i, j, k) grid, reduction axis
    last, parallel semantics on i/j for megacore sharding.
    """
    if trans_a:
        K, M = a.shape
        K2, N = b.shape
    else:
        M, K = a.shape
        K2, N = b.shape
    assert K == K2, (a.shape, b.shape, trans_a)

    if tk_target is None:
        # bf16 streams can afford a larger contraction tile within scoped VMEM.
        tk_target = 2048 if max(a.dtype.itemsize, b.dtype.itemsize) <= 2 else 1024

    a_bytes = a.size * a.dtype.itemsize
    b_bytes = b.size * b.dtype.itemsize
    # A-residency across multiple k blocks only for the TN layout (sublane slice);
    # in the NN layout K must fit one tile so no in-kernel lane slicing is needed.
    a_resident = (M <= _RESIDENT_MAX_MINOR and a_bytes <= _RESIDENT_MAX_BYTES
                  and (trans_a or K <= tk_target))
    b_resident = N <= _RESIDENT_MAX_MINOR and b_bytes <= _RESIDENT_MAX_BYTES

    tm, Mp = (M, M) if a_resident else _tile(M, tm_target)
    tn, Np = (N, N) if b_resident else _tile(N, tn_target)
    tk, Kp = _tile(K, tk_target)

    # Zero-pad up to tile multiples (no-op for aligned shapes; zeros are exact
    # for the contraction, padded output rows/cols are sliced off below).
    pad_a = ((0, Kp - K), (0, Mp - M)) if trans_a else ((0, Mp - M), (0, Kp - K))
    pad_b = ((0, Kp - K), (0, Np - N))
    if any(p for pair in pad_a for p in pair):
        a = jnp.pad(a, pad_a)
    if any(p for pair in pad_b for p in pair):
        b = jnp.pad(b, pad_b)

    grid = (Mp // tm, Np // tn, Kp // tk)
    grid_k = grid[2]

    if a_resident:
        a_spec = pl.BlockSpec(a.shape, lambda i, j, k: (0, 0))
    elif trans_a:
        a_spec = pl.BlockSpec((tk, tm), lambda i, j, k: (k, i))
    else:
        a_spec = pl.BlockSpec((tm, tk), lambda i, j, k: (i, k))
    if b_resident:
        b_spec = pl.BlockSpec(b.shape, lambda i, j, k: (0, 0))
    else:
        b_spec = pl.BlockSpec((tk, tn), lambda i, j, k: (k, j))
    o_spec = pl.BlockSpec((tm, tn), lambda i, j, k: (i, j))

    if grid_k == 1:
        kernel = functools.partial(_mm_kernel_single, trans_a=trans_a)
        scratch = []
    else:
        kernel = functools.partial(
            _mm_kernel_acc, trans_a=trans_a, a_resident=a_resident,
            b_resident=b_resident, tk=tk)
        scratch = [pltpu.VMEM((tm, tn), jnp.float32)]

    cost = pl.CostEstimate(
        flops=2 * M * N * K,
        transcendentals=0,
        bytes_accessed=int(a_bytes + b_bytes + M * N * 4))

    out = pl.pallas_call(
        kernel,
        out_shape=jax.ShapeDtypeStruct((Mp, Np), jnp.float32),
        grid_spec=pltpu.PrefetchScalarGridSpec(
            num_scalar_prefetch=0,
            grid=grid,
            in_specs=[a_spec, b_spec],
            out_specs=o_spec,
            scratch_shapes=scratch),
        compiler_params=pltpu.CompilerParams(
            dimension_semantics=("parallel", "parallel", "arbitrary")),
        cost_estimate=cost,
    )(a, b)

    if Mp != M or Np != N:
        out = out[:M, :N]
    return out


def pallas_matmul(a, b, **kw):
    """a @ b : (M, K) @ (K, N) -> (M, N) f32."""
    return _tiled_matmul(a, b, trans_a=False, **kw)


def pallas_matmul_tn(a, b, **kw):
    """a.T @ b without materializing a.T : a (K, M), b (K, N) -> (M, N) f32."""
    return _tiled_matmul(a, b, trans_a=True, **kw)


# ----------------------------------------------------------------------------
# CholeskyQR2 (replaces tall-skinny Householder QR in the range finder)
# ----------------------------------------------------------------------------
def _cholesky_qr_step(y, eps=1e-6):
    r = y.shape[1]
    g = pallas_matmul_tn(y, y)                         # Gram (R, R) f32, one stream over y
    shift = eps * (jnp.trace(g) / r)                   # tiny relative shift for safety
    chol = jnp.linalg.cholesky(g + shift * jnp.eye(r, dtype=g.dtype))
    # TODO(synk): (R x R) Cholesky / triangular solve have no clean Pallas equivalent.
    inv_l = solve_triangular(chol, jnp.eye(r, dtype=g.dtype), lower=True)
    # (M, R) @ (R, R) core product: tiny, plain jnp (a kernel launch is overhead).
    return jnp.dot(y, inv_l.T, precision=lax.Precision.HIGHEST)


def cholesky_qr2(y):
    """Orthonormal basis of span(y) via CholeskyQR2 (two Gram/Cholesky passes)."""
    return _cholesky_qr_step(_cholesky_qr_step(y))


# ----------------------------------------------------------------------------
# SVDInit forward (randomized low-rank SVD, torch.svd_lowrank structure, niter=2)
# ----------------------------------------------------------------------------
def svd_init_forward(x, rank, *, key, niter=2):
    """Returns (u * sqrt(s), v * sqrt(s)) for a rank-`rank` randomized SVD of x."""
    x_f32 = x.astype(jnp.float32)
    M, N = x_f32.shape
    # bf16 copy streamed by the bandwidth-bound range-finding matmuls (half the
    # HBM bytes); the f32 copy is kept for the final core capture q.T @ x.
    x_bf16 = x_f32.astype(jnp.bfloat16)

    # TODO(synk): torch.svd_lowrank seeds its Gaussian test matrix with
    # torch.manual_seed(42); we use a JAX key (same distribution, different stream).
    omega = jax.random.normal(key, (N, rank), dtype=jnp.float32).astype(jnp.bfloat16)

    # Range finding / power iteration: bf16 operands on the MXU, f32 accumulation.
    # QR count (1 + 2*niter) preserves torch.svd_lowrank's get_approximate_basis
    # structure, with CholeskyQR2 in place of Householder QR.
    y = pallas_matmul(x_bf16, omega)                               # (M, R)
    q = cholesky_qr2(y)
    for _ in range(niter):
        z = pallas_matmul_tn(x_bf16, q.astype(jnp.bfloat16))       # x.T @ q -> (N, R)
        q = cholesky_qr2(z)
        y = pallas_matmul(x_bf16, q.astype(jnp.bfloat16))          # x @ q   -> (M, R)
        q = cholesky_qr2(y)

    # Core capture and SVD of the small (R, N) matrix in f32.
    b = pallas_matmul_tn(q, x_f32)                                 # q.T @ x -> (R, N)
    # TODO(synk): dense SVD of the small (R, N) core has no clean Pallas equivalent.
    u_b, s, vt = jnp.linalg.svd(b, full_matrices=False)
    sqrt_s = jnp.sqrt(s)                                           # R scalars, once

    # sqrt(s) scaling fused into the tiny cores (no extra (M,R)/(N,R) HBM pass).
    u = jnp.dot(q, u_b * sqrt_s[None, :], precision=lax.Precision.HIGHEST)  # (M, R)
    v = (vt * sqrt_s[:, None]).T                                             # (N, R)
    return u.astype(jnp.float32), v.astype(jnp.float32)


def default_rank(size, compression=10.0):
    M, N = size
    return max(math.ceil((M * N) / (compression * (M + N))), 1)


# ----------------------------------------------------------------------------
# Main
# ----------------------------------------------------------------------------
if __name__ == "__main__":
    def _check(out, ref, tol):
        scale = float(jnp.max(jnp.abs(ref))) + 1e-6
        err = float(jnp.max(jnp.abs(out.astype(jnp.float32) - ref)))
        assert err < tol * scale, (err, tol * scale)

    M, N = 128, 256
    rank = 16  # SVDInit(size=(M, N), rank=16)

    key = jax.random.PRNGKey(0)
    (k_a, k_b, k_omega, k_p1, k_p2, k_p3, k_p4, k_p5, k_p6) = jax.random.split(key, 9)

    # Deterministic test input with exact rank `rank`, so the rank-R factorization
    # is validated by reconstruction against x itself.
    a_fac = jax.random.normal(k_a, (M, rank), dtype=jnp.float32)
    b_fac = jax.random.normal(k_b, (rank, N), dtype=jnp.float32)
    x = (a_fac @ b_fac) / jnp.sqrt(jnp.float32(rank))

    # --- unit check 1: single-k fast path, VMEM-resident operands (f32) ---
    p_n = jax.random.normal(k_p1, (N, rank), dtype=jnp.float32)
    p_m = jax.random.normal(k_p2, (M, rank), dtype=jnp.float32)
    _check(pallas_matmul(x, p_n),
           jnp.dot(x, p_n, precision=lax.Precision.HIGHEST), 1e-3)
    _check(pallas_matmul_tn(x, p_m),
           jnp.dot(x.T, p_m, precision=lax.Precision.HIGHEST), 1e-3)

    # --- unit check 2: tiled multi-k accumulator path with edge padding (f32) ---
    a_big = jax.random.normal(k_p3, (520, 650), dtype=jnp.float32)
    b_big = jax.random.normal(k_p4, (650, 500), dtype=jnp.float32)
    out_big = _tiled_matmul(a_big, b_big, trans_a=False,
                            tm_target=128, tn_target=128, tk_target=128)
    _check(out_big, jnp.dot(a_big, b_big, precision=lax.Precision.HIGHEST), 2e-3)

    # --- unit check 3: bf16 streaming A, VMEM-resident skinny B sliced along K ---
    a_s = jax.random.normal(k_p5, (512, 2048), dtype=jnp.float32)
    b_s = jax.random.normal(k_p6, (2048, rank), dtype=jnp.float32)
    out_s = _tiled_matmul(a_s.astype(jnp.bfloat16), b_s.astype(jnp.bfloat16),
                          trans_a=False, tm_target=256, tn_target=256, tk_target=512)
    _check(out_s, jnp.dot(a_s, b_s, precision=lax.Precision.HIGHEST), 2e-2)

    # --- unit check 4: TN path, VMEM-resident skinny A sliced along K (f32) ---
    out_tn = _tiled_matmul(b_s, a_s.T, trans_a=True,
                           tm_target=256, tn_target=256, tk_target=512)
    _check(out_tn, jnp.dot(b_s.T, a_s.T, precision=lax.Precision.HIGHEST), 2e-3)

    # --- SVDInit forward ---
    u, v = svd_init_forward(x, rank, key=k_omega)
    u, v = jax.block_until_ready((u, v))

    assert u.shape == (M, rank) and v.shape == (N, rank)
    assert u.dtype == jnp.float32 and v.dtype == jnp.float32

    # u @ v.T == Q Q^T x must reconstruct the exactly-rank-R input up to
    # bf16 range-finding + f32 CholeskyQR2/SVD error.
    recon = jnp.dot(u, v.T, precision=lax.Precision.HIGHEST)
    rel_err = jnp.linalg.norm(recon - x) / jnp.linalg.norm(x)
    rel_err = float(jax.block_until_ready(rel_err))
    assert math.isfinite(rel_err) and rel_err < 2.5e-2, f"mismatch: {rel_err}"

    print("KERNEL_OK")
</pallas_src>

<mosaic_0001>
module attributes {stable_mosaic.version = 11 : i64} {
  func.func @_mm_kernel_single(%arg0: i32, %arg1: i32, %arg2: i32, %arg3: memref<128x256xf32, #tpu.memory_space<vmem>>, %arg4: memref<256x16xf32, #tpu.memory_space<vmem>>, %arg5: memref<128x16xf32, #tpu.memory_space<vmem>>) attributes {dimension_semantics = [#tpu.dimension_semantics<parallel>, #tpu.dimension_semantics<parallel>, #tpu.dimension_semantics<arbitrary>], iteration_bounds = array<i64: 1, 1, 1>, scalar_prefetch = 0 : i64, scratch_operands = 0 : i64, tpu.core_type = #tpu.core_type<tc>, window_params = [{pipeline_mode = #tpu.pipeline_mode<synchronous>, transform_indices = @transform_0, window_bounds = array<i64: 128, 256>}, {pipeline_mode = #tpu.pipeline_mode<synchronous>, transform_indices = @transform_1, window_bounds = array<i64: 256, 16>}, {transform_indices = @transform_2, window_bounds = array<i64: 128, 16>}]} {
    %c0 = arith.constant 0 : index
    %c0_0 = arith.constant 0 : index
    %0 = vector.load %arg3[%c0, %c0_0] : memref<128x256xf32, #tpu.memory_space<vmem>>, vector<128x256xf32>
    %c0_1 = arith.constant 0 : index
    %c0_2 = arith.constant 0 : index
    %1 = vector.load %arg4[%c0_1, %c0_2] : memref<256x16xf32, #tpu.memory_space<vmem>>, vector<256x16xf32>
    %cst = arith.constant dense<0.000000e+00> : vector<128x16xf32>
    %2 = tpu.matmul %0, %1, %cst {dimension_numbers = #tpu.dot_dimension_numbers<[1], [0], [0], [1], [0, 0, 1, 1], [], []>} : vector<128x256xf32>, vector<256x16xf32>, vector<128x16xf32> -> vector<128x16xf32>
    %c0_3 = arith.constant 0 : index
    %c0_4 = arith.constant 0 : index
    %3 = vector.load %arg5[%c0_3, %c0_4] : memref<128x16xf32, #tpu.memory_space<vmem>>, vector<128x16xf32>
    tpu.vector_store %arg5[%c0_3, %c0_4], %2 {strides = array<i32>} : memref<128x16xf32, #tpu.memory_space<vmem>>, vector<128x16xf32>,
    return
  }
  func.func @transform_0(%arg0: i32, %arg1: i32, %arg2: i32) -> (i32, i32) {
    %c0_i32 = arith.constant 0 : i32
    %c0_i32_0 = arith.constant 0 : i32
    %c0_i32_1 = arith.constant 0 : i32
    return %c0_i32, %c0_i32_0 : i32, i32
  }
  func.func @transform_1(%arg0: i32, %arg1: i32, %arg2: i32) -> (i32, i32) {
    %c0_i32 = arith.constant 0 : i32
    %c0_i32_0 = arith.constant 0 : i32
    %c0_i32_1 = arith.constant 0 : i32
    return %c0_i32, %c0_i32_0 : i32, i32
  }
  func.func @transform_2(%arg0: i32, %arg1: i32, %arg2: i32) -> (i32, i32) {
    %c0_i32 = arith.constant 0 : i32
    return %arg0, %arg1 : i32, i32
  }
}

</mosaic_0001>

<llo_original>
// kernel: tpu_custom_call.1
$region0: #{tpu_custom_call.1}
  #allocation0 [shape = 'u32[]', space=smem, size = 0x4, offset = 0x4, fixed_abs, tag = 'smem constant byte address 0x4 - core index']
  #allocation1 [shape = 'u32[144,128]{1,0:T(1,128)}', space=vmem, size = 0x12000, scoped, tag = 'internal scratch']
  %s0 = inlined_call_operand.vmem [shape: f32[128,256], index: 0, kind: input, shape index: {}]
  %s1 = inlined_call_operand.vmem [shape: f32[256,16], index: 1, kind: input, shape index: {}]
  %s2 = inlined_call_operand.vmem [shape: f32[128,16], index: 2, kind: output, shape index: {}]
  %s3 = sld [smem:[#allocation0]]
  $region18: #{tpu_custom_call.1} parent=0
    _
  %s5 = ssub.s32 1, %s3
  %s6 = scalar_select 0, %s5, %s3
  // Predicated region
  $region2: #{tpu_custom_call.1} parent=0 // pred_check
    _
  $region3: #{tpu_custom_call.1} parent=0 // pred_check_branch
    %8 = sbr.rel (0) target = $region5
  $region4: #{tpu_custom_call.1} parent=0 // pred_region
    _
  $region5: #{tpu_custom_call.1} parent=0 // pred_fallthru
    _
  // Predicated region
  $region6: #{tpu_custom_call.1} parent=0 // pred_check
    _
  $region7: #{tpu_custom_call.1} parent=0 // pred_check_branch
    %10 = sbr.rel (0) target = $region9
  $region8: #{tpu_custom_call.1} parent=0 // pred_region
    _
  $region9: #{tpu_custom_call.1} parent=0 // pred_fallthru
    _
  %v11 = vld [vmem:[%s0] sm:$0xff]
  %v12 = vld [vmem:[%s0 + $0x8] sm:$0xff]
  %v13 = vld [vmem:[%s0 + $0x10] sm:$0xff]
  %v14 = vld [vmem:[%s0 + $0x18] sm:$0xff]
  %v15 = vld [vmem:[%s0 + $0x20] sm:$0xff]
  %v16 = vld [vmem:[%s0 + $0x28] sm:$0xff]
  %v17 = vld [vmem:[%s0 + $0x30] sm:$0xff]
  %v18 = vld [vmem:[%s0 + $0x38] sm:$0xff]
  %v19 = vld [vmem:[%s0 + $0x40] sm:$0xff]
  %v20 = vld [vmem:[%s0 + $0x48] sm:$0xff]
  %v21 = vld [vmem:[%s0 + $0x50] sm:$0xff]
  %v22 = vld [vmem:[%s0 + $0x58] sm:$0xff]
  %v23 = vld [vmem:[%s0 + $0x60] sm:$0xff]
  %v24 = vld [vmem:[%s0 + $0x68] sm:$0xff]
  %v25 = vld [vmem:[%s0 + $0x70] sm:$0xff]
  %v26 = vld [vmem:[%s0 + $0x78] sm:$0xff]
  %v27 = vld [vmem:[%s0 + $0x80] sm:$0xff]
  %v28 = vld [vmem:[%s0 + $0x88] sm:$0xff]
  %v29 = vld [vmem:[%s0 + $0x90] sm:$0xff]
  %v30 = vld [vmem:[%s0 + $0x98] sm:$0xff]
  %v31 = vld [vmem:[%s0 + $0xa0] sm:$0xff]
  %v32 = vld [vmem:[%s0 + $0xa8] sm:$0xff]
  %v33 = vld [vmem:[%s0 + $0xb0] sm:$0xff]
  %v34 = vld [vmem:[%s0 + $0xb8] sm:$0xff]
  %v35 = vld [vmem:[%s0 + $0xc0] sm:$0xff]
  %v36 = vld [vmem:[%s0 + $0xc8] sm:$0xff]
  %v37 = vld [vmem:[%s0 + $0xd0] sm:$0xff]
  %v38 = vld [vmem:[%s0 + $0xd8] sm:$0xff]
  %v39 = vld [vmem:[%s0 + $0xe0] sm:$0xff]
  %v40 = vld [vmem:[%s0 + $0xe8] sm:$0xff]
  %v41 = vld [vmem:[%s0 + $0xf0] sm:$0xff]
  %v42 = vld [vmem:[%s0 + $0xf8] sm:$0xff]
  %v43 = vld [vmem:[%s1] sm:$0xff]
  %v44 = vld [vmem:[%s1 + $0x8] sm:$0xff]
  %v45 = vld [vmem:[%s1 + $0x10] sm:$0xff]
  %v46 = vld [vmem:[%s1 + $0x18] sm:$0xff]
  %v47 = vld [vmem:[%s1 + $0x20] sm:$0xff]
  %v48 = vld [vmem:[%s1 + $0x28] sm:$0xff]
  %v49 = vld [vmem:[%s1 + $0x30] sm:$0xff]
  %v50 = vld [vmem:[%s1 + $0x38] sm:$0xff]
  %v51 = vld [vmem:[%s1 + $0x40] sm:$0xff]
  %v52 = vld [vmem:[%s1 + $0x48] sm:$0xff]
  %v53 = vld [vmem:[%s1 + $0x50] sm:$0xff]
  %v54 = vld [vmem:[%s1 + $0x58] sm:$0xff]
  %v55 = vld [vmem:[%s1 + $0x60] sm:$0xff]
  %v56 = vld [vmem:[%s1 + $0x68] sm:$0xff]
  %v57 = vld [vmem:[%s1 + $0x70] sm:$0xff]
  %v58 = vld [vmem:[%s1 + $0x78] sm:$0xff]
  %v59 = vld [vmem:[%s1 + $0x80] sm:$0xff]
  %v60 = vld [vmem:[%s1 + $0x88] sm:$0xff]
  %v61 = vld [vmem:[%s1 + $0x90] sm:$0xff]
  %v62 = vld [vmem:[%s1 + $0x98] sm:$0xff]
  %v63 = vld [vmem:[%s1 + $0xa0] sm:$0xff]
  %v64 = vld [vmem:[%s1 + $0xa8] sm:$0xff]
  %v65 = vld [vmem:[%s1 + $0xb0] sm:$0xff]
  %v66 = vld [vmem:[%s1 + $0xb8] sm:$0xff]
  %v67 = vld [vmem:[%s1 + $0xc0] sm:$0xff]
  %v68 = vld [vmem:[%s1 + $0xc8] sm:$0xff]
  %v69 = vld [vmem:[%s1 + $0xd0] sm:$0xff]
  %v70 = vld [vmem:[%s1 + $0xd8] sm:$0xff]
  %v71 = vld [vmem:[%s1 + $0xe0] sm:$0xff]
  %v72 = vld [vmem:[%s1 + $0xe8] sm:$0xff]
  %v73 = vld [vmem:[%s1 + $0xf0] sm:$0xff]
  %v74 = vld [vmem:[%s1 + $0xf8] sm:$0xff]
  %75 = vmatprep.subr.mxu0 0.0
  %76 = vmatpush1.msra.mxu0 %v43
  %77 = vmatprep.subr.mxu0 0.0
  %78 = vmatpush1.msra.mxu0 %v44
  %79 = vmatprep.subr.mxu0 0.0
  %80 = vmatpush1.msra.mxu0 %v45
  %81 = vmatprep.subr.mxu0 0.0
  %82 = vmatpush1.msra.mxu0 %v46
  %83 = vmatprep.subr.mxu0 0.0
  %84 = vmatpush1.msra.mxu0 %v47
  %85 = vmatprep.subr.mxu0 0.0
  %86 = vmatpush1.msra.mxu0 %v48
  %87 = vmatprep.subr.mxu0 0.0
  %88 = vmatpush1.msra.mxu0 %v49
  %89 = vmatprep.subr.mxu0 0.0
  %90 = vmatpush1.msra.mxu0 %v50
  %91 = vmatprep.subr.mxu0 0.0
  %92 = vmatpush1.msra.mxu0 %v51
  %93 = vmatprep.subr.mxu0 0.0
  %94 = vmatpush1.msra.mxu0 %v52
  %95 = vmatprep.subr.mxu0 0.0
  %96 = vmatpush1.msra.mxu0 %v53
  %97 = vmatprep.subr.mxu0 0.0
  %98 = vmatpush1.msra.mxu0 %v54
  %99 = vmatprep.subr.mxu0 0.0
  %100 = vmatpush1.msra.mxu0 %v55
  %101 = vmatprep.subr.mxu0 0.0
  %102 = vmatpush1.msra.mxu0 %v56
  %103 = vmatprep.subr.mxu0 0.0
  %104 = vmatpush1.msra.mxu0 %v57
  %105 = vmatprep.subr.mxu0 0.0
  %106 = vmatpush1.msra.mxu0 %v58
  %107 = vmatprep.subr.mxu0 0.0
  %108 = vmatpush1.msra.mxu0 %v59
  %109 = vmatprep.subr.mxu0 0.0
  %110 = vmatpush1.msra.mxu0 %v60
  %111 = vmatprep.subr.mxu0 0.0
  %112 = vmatpush1.msra.mxu0 %v61
  %113 = vmatprep.subr.mxu0 0.0
  %114 = vmatpush1.msra.mxu0 %v62
  %115 = vmatprep.subr.mxu0 0.0
  %116 = vmatpush1.msra.mxu0 %v63
  %117 = vmatprep.subr.mxu0 0.0
  %118 = vmatpush1.msra.mxu0 %v64
  %119 = vmatprep.subr.mxu0 0.0
  %120 = vmatpush1.msra.mxu0 %v65
  %121 = vmatprep.subr.mxu0 0.0
  %122 = vmatpush1.msra.mxu0 %v66
  %123 = vmatprep.subr.mxu0 0.0
  %124 = vmatpush1.msra.mxu0 %v67
  %125 = vmatprep.subr.mxu0 0.0
  %126 = vmatpush1.msra.mxu0 %v68
  %127 = vmatprep.subr.mxu0 0.0
  %128 = vmatpush1.msra.mxu0 %v69
  %129 = vmatprep.subr.mxu0 0.0
  %130 = vmatpush1.msra.mxu0 %v70
  %131 = vmatprep.subr.mxu0 0.0
  %132 = vmatpush1.msra.mxu0 %v71
  %133 = vmatprep.subr.mxu0 0.0
  %134 = vmatpush1.msra.mxu0 %v72
  %135 = vmatprep.subr.mxu0 0.0
  %136 = vmatpush1.msra.mxu0 %v73
  %137 = vmatprep.subr.mxu0 0.0
  %138 = vmatpush1.msra.mxu0 %v74
  %139 = vmatprep.mubr.f32.mxu0 %v12
  %140 = vmatmul.mubr.f32.gmra.mrb[0].mxu0 %v11
  %v141 = vpop.f32.mrb[0].mxu0
  %v142 = vadd.f32 0.0, %v141
  %v143 = vpop.f32.mrb[0].mxu0
  %144 = vmatprep.mubr.f32.mxu0 %v14
  %145 = vmatmul.mubr.f32.gmra.mrb[0].mxu0 %v13
  %v146 = vpop.f32.mrb[0].mxu0
  %v147 = vadd.f32 0.0, %v146
  %v148 = vpop.f32.mrb[0].mxu0
  %149 = vmatprep.mubr.f32.mxu0 %v16
  %150 = vmatmul.mubr.f32.gmra.mrb[0].mxu0 %v15
  %v151 = vpop.f32.mrb[0].mxu0
  %v152 = vadd.f32 0.0, %v151
  %v153 = vpop.f32.mrb[0].mxu0
  %154 = vmatprep.mubr.f32.mxu0 %v18
  %155 = vmatmul.mubr.f32.gmra.mrb[0].mxu0 %v17
  %v156 = vpop.f32.mrb[0].mxu0
  %v157 = vadd.f32 0.0, %v156
  %v158 = vpop.f32.mrb[0].mxu0
  %159 = vmatprep.mubr.f32.mxu0 %v20
  %160 = vmatmul.mubr.f32.gmra.mrb[0].mxu0 %v19
  %v161 = vpop.f32.mrb[0].mxu0
  %v162 = vadd.f32 0.0, %v161
  %v163 = vpop.f32.mrb[0].mxu0
  %164 = vmatprep.mubr.f32.mxu0 %v22
  %165 = vmatmul.mubr.f32.gmra.mrb[0].mxu0 %v21
  %v166 = vpop.f32.mrb[0].mxu0
  %v167 = vadd.f32 0.0, %v166
  %v168 = vpop.f32.mrb[0].mxu0
  %169 = vmatprep.mubr.f32.mxu0 %v24
  %170 = vmatmul.mubr.f32.gmra.mrb[0].mxu0 %v23
  %v171 = vpop.f32.mrb[0].mxu0
  %v172 = vadd.f32 0.0, %v171
  %v173 = vpop.f32.mrb[0].mxu0
  %174 = vmatprep.mubr.f32.mxu0 %v26
  %175 = vmatmul.mubr.f32.gmra.mrb[0].mxu0 %v25
  %v176 = vpop.f32.mrb[0].mxu0
  %v177 = vadd.f32 0.0, %v176
  %v178 = vpop.f32.mrb[0].mxu0
  %179 = vmatprep.mubr.f32.mxu0 %v28
  %180 = vmatmul.mubr.f32.gmra.mrb[0].mxu0 %v27
  %v181 = vpop.f32.mrb[0].mxu0
  %v182 = vadd.f32 0.0, %v181
  %v183 = vpop.f32.mrb[0].mxu0
  %184 = vmatprep.mubr.f32.mxu0 %v30
  %185 = vmatmul.mubr.f32.gmra.mrb[0].mxu0 %v29
  %v186 = vpop.f32.mrb[0].mxu0
  %v187 = vadd.f32 0.0, %v186
  %v188 = vpop.f32.mrb[0].mxu0
  %189 = vmatprep.mubr.f32.mxu0 %v32
  %190 = vmatmul.mubr.f32.gmra.mrb[0].mxu0 %v31
  %v191 = vpop.f32.mrb[0].mxu0
  %v192 = vadd.f32 0.0, %v191
  %v193 = vpop.f32.mrb[0].mxu0
  %194 = vmatprep.mubr.f32.mxu0 %v34
  %195 = vmatmul.mubr.f32.gmra.mrb[0].mxu0 %v33
  %v196 = vpop.f32.mrb[0].mxu0
  %v197 = vadd.f32 0.0, %v196
  %v198 = vpop.f32.mrb[0].mxu0
  %199 = vmatprep.mubr.f32.mxu0 %v36
  %200 = vmatmul.mubr.f32.gmra.mrb[0].mxu0 %v35
  %v201 = vpop.f32.mrb[0].mxu0
  %v202 = vadd.f32 0.0, %v201
  %v203 = vpop.f32.mrb[0].mxu0
  %204 = vmatprep.mubr.f32.mxu0 %v38
  %205 = vmatmul.mubr.f32.gmra.mrb[0].mxu0 %v37
  %v206 = vpop.f32.mrb[0].mxu0
  %v207 = vadd.f32 0.0, %v206
  %v208 = vpop.f32.mrb[0].mxu0
  %209 = vmatprep.mubr.f32.mxu0 %v40
  %210 = vmatmul.mubr.f32.gmra.mrb[0].mxu0 %v39
  %v211 = vpop.f32.mrb[0].mxu0
  %v212 = vadd.f32 0.0, %v211
  %v213 = vpop.f32.mrb[0].mxu0
  %214 = vmatprep.mubr.f32.mxu0 %v42
  %215 = vmatmul.mubr.f32.gmra.mrb[0].mxu0 %v41
  %v216 = vpop.f32.mrb[0].mxu0
  %v217 = vadd.f32 0.0, %v216
  %v218 = vpop.f32.mrb[0].mxu0
  %219 = vdwg.mxu0
  %vm220 = vcmask 130048
  %221 = vst.msk [vmem:[%s2] sm:$0xff] %vm220, %v142
  %222 = vst.msk [vmem:[%s2 + $0x8] sm:$0xff] %vm220, %v147
  %223 = vst.msk [vmem:[%s2 + $0x10] sm:$0xff] %vm220, %v152
  %224 = vst.msk [vmem:[%s2 + $0x18] sm:$0xff] %vm220, %v157
  %225 = vst.msk [vmem:[%s2 + $0x20] sm:$0xff] %vm220, %v162
  %226 = vst.msk [vmem:[%s2 + $0x28] sm:$0xff] %vm220, %v167
  %227 = vst.msk [vmem:[%s2 + $0x30] sm:$0xff] %vm220, %v172
  %228 = vst.msk [vmem:[%s2 + $0x38] sm:$0xff] %vm220, %v177
  %229 = vst.msk [vmem:[%s2 + $0x40] sm:$0xff] %vm220, %v182
  %230 = vst.msk [vmem:[%s2 + $0x48] sm:$0xff] %vm220, %v187
  %231 = vst.msk [vmem:[%s2 + $0x50] sm:$0xff] %vm220, %v192
  %232 = vst.msk [vmem:[%s2 + $0x58] sm:$0xff] %vm220, %v197
  %233 = vst.msk [vmem:[%s2 + $0x60] sm:$0xff] %vm220, %v202
  %234 = vst.msk [vmem:[%s2 + $0x68] sm:$0xff] %vm220, %v207
  %235 = vst.msk [vmem:[%s2 + $0x70] sm:$0xff] %vm220, %v212
  %236 = vst.msk [vmem:[%s2 + $0x78] sm:$0xff] %vm220, %v217
  // Predicated region
  $region10: #{tpu_custom_call.1} parent=0 // pred_check
    _
  $region11: #{tpu_custom_call.1} parent=0 // pred_check_branch
    %238 = sbr.rel (0) target = $region13
  $region12: #{tpu_custom_call.1} parent=0 // pred_region
    _
  $region13: #{tpu_custom_call.1} parent=0 // pred_fallthru
    _
  // Predicated region
  $region14: #{tpu_custom_call.1} parent=0 // pred_check
    _
  $region15: #{tpu_custom_call.1} parent=0 // pred_check_branch
    %240 = sbr.rel (0) target = $region17
  $region16: #{tpu_custom_call.1} parent=0 // pred_region
    _
  $region17: #{tpu_custom_call.1} parent=0 // pred_fallthru
    _

</llo_original>
